<compile_context>
chip_gen: v5e
topology: v5e:2x2
jax: 0.10.0
libtpu: 0.0.40
codegen_flags: <defaults>
</compile_context>

<pallas_src>
import jax
import jax.numpy as jnp
from jax import lax
from jax.experimental import pallas as pl
from jax.experimental.pallas import tpu as pltpu


# ----------------------------------------------------------------------------
# helpers
# ----------------------------------------------------------------------------
def _round_up(x: int, m: int) -> int:
    return ((x + m - 1) // m) * m


def _cdiv(a: int, b: int) -> int:
    return (a + b - 1) // b


def _vmem_capacity_bytes() -> int:
    try:
        info = pltpu.get_tpu_info()
        cap = getattr(info, "vmem_capacity_bytes", None)
        if cap:
            return int(cap)
    except Exception:
        pass
    return 64 * 1024 * 1024  # conservative (v7x per-TensorCore)


# ----------------------------------------------------------------------------
# kernels
# ----------------------------------------------------------------------------
def perception_kernel(x_ref, w1_ref, b1_ref, w2_ref, b2_ref, o_ref):
    # Layer 1 on the MXU with f32 accumulation; bias added in f32.
    h = jnp.dot(x_ref[...], w1_ref[...], preferred_element_type=jnp.float32)
    h = h + b1_ref[...]                       # (1, hid) broadcasts over rows
    # sigmoid(x) = 0.5*(tanh(x/2)+1): single EUP transcendental, no VALU divide.
    h = 0.5 * (jnp.tanh(0.5 * h) + 1.0)
    # Layer 2: cast once to the weight dtype (no-op for f32), accumulate in f32.
    y = jnp.dot(h.astype(w2_ref.dtype), w2_ref[...],
                preferred_element_type=jnp.float32)
    o_ref[...] = (y + b2_ref[...]).astype(o_ref.dtype)


def _make_chunked_kernel(n_chunks: int, hid_c: int):
    """Kernel body that loops over hid chunks so the full (bm, hid_p) activation
    is never materialized; layer-2 contributions accumulate into (bm, out_p) f32."""

    def kernel(x_ref, w1_ref, b1_ref, w2_ref, b2_ref, o_ref):
        x = x_ref[...]

        def body(c, acc):
            off = pl.multiple_of(c * hid_c, 128)
            h = jnp.dot(x, w1_ref[:, pl.ds(off, hid_c)],
                        preferred_element_type=jnp.float32)
            h = h + b1_ref[:, pl.ds(off, hid_c)]
            h = 0.5 * (jnp.tanh(0.5 * h) + 1.0)
            return acc + jnp.dot(h.astype(w2_ref.dtype),
                                 w2_ref[pl.ds(off, hid_c), :],
                                 preferred_element_type=jnp.float32)

        acc0 = jnp.zeros(o_ref.shape, jnp.float32)
        acc = lax.fori_loop(0, n_chunks, body, acc0)
        o_ref[...] = (acc + b2_ref[...]).astype(o_ref.dtype)

    return kernel


# ----------------------------------------------------------------------------
# parameter preparation (done ONCE, not per forward call)
# ----------------------------------------------------------------------------
def prepare_params(w1, b1, w2, b2, *, compute_dtype="auto", hid_block=None):
    """Pad weights to lane-dense (multiple-of-128) shapes and cast matmul inputs.

    compute_dtype: "auto" -> bfloat16 MXU inputs (the performance default on
    v6e/v7x); pass jnp.float32 for an exact path. Biases stay f32.
    hid_block: None -> auto (chunk only for large hidden sizes); int -> force
    an in-kernel hid chunk size (rounded to a multiple of 128).
    """
    in_f, hid = w1.shape
    out_f = w2.shape[1]

    if compute_dtype == "auto":
        compute_dtype = jnp.bfloat16
    compute_dtype = jnp.dtype(compute_dtype)
    use_bf16 = compute_dtype == jnp.dtype(jnp.bfloat16)

    in_p = _round_up(in_f, 128)
    out_p = _round_up(out_f, 128)
    hid_p0 = _round_up(hid, 128)

    # Decide in-kernel hid chunking (keeps the (bm, hid) intermediate small).
    if hid_block is None:
        hid_block_eff = 512 if hid_p0 >= 2048 else None
    else:
        hid_block_eff = _round_up(int(hid_block), 128)
    if hid_block_eff is not None and hid_p0 > hid_block_eff:
        n_chunks = _cdiv(hid_p0, hid_block_eff)
        hid_c = _round_up(_cdiv(hid_p0, n_chunks), 128)
        hid_p = hid_c * n_chunks
    else:
        n_chunks, hid_c, hid_p = 1, None, hid_p0

    # Zero padding is mathematically transparent: padded hidden lanes see
    # sigmoid(0)=0.5 but multiply all-zero rows of the padded W2 -> contribute 0.
    w1_p = jnp.pad(w1.astype(compute_dtype), ((0, in_p - in_f), (0, hid_p - hid)))
    w2_p = jnp.pad(w2.astype(compute_dtype), ((0, hid_p - hid), (0, out_p - out_f)))
    b1_p = jnp.pad(b1.astype(jnp.float32), (0, hid_p - hid)).reshape(1, hid_p)
    b2_p = jnp.pad(b2.astype(jnp.float32), (0, out_p - out_f)).reshape(1, out_p)

    return dict(w1=w1_p, b1=b1_p, w2=w2_p, b2=b2_p,
                in_f=in_f, hid=hid, out_f=out_f,
                in_p=in_p, hid_p=hid_p, out_p=out_p,
                n_chunks=n_chunks, hid_c=hid_c,
                compute_dtype=compute_dtype, use_bf16=use_bf16)


# ----------------------------------------------------------------------------
# forward
# ----------------------------------------------------------------------------
def perception_forward(x, params, *, block_rows=None):
    """x: [B, in_features]; params: output of prepare_params()."""
    B, in_f = x.shape
    assert in_f == params["in_f"], "feature mismatch"
    out_dtype = x.dtype

    in_p, hid_p, out_p = params["in_p"], params["hid_p"], params["out_p"]
    n_chunks, hid_c = params["n_chunks"], params["hid_c"]
    cdt = params["compute_dtype"]
    use_bf16 = params["use_bf16"]

    itemsize = jnp.dtype(cdt).itemsize
    out_itemsize = jnp.dtype(out_dtype).itemsize
    row_align = 16 if itemsize == 2 else 8    # bf16 packs 16 rows per vreg

    if block_rows is None:
        block_rows = 2048 if use_bf16 else 1024

    # ---- VMEM-aware block sizing (v7x: 64 MiB/TC; v5e scoped default 16 MiB) --
    vmem_cap = _vmem_capacity_bytes()
    usable = int(vmem_cap * 0.8)
    hid_eff = hid_c if hid_c is not None else hid_p
    weight_bytes = 2 * ((in_p * hid_p + hid_p * out_p) * itemsize
                        + (hid_p + out_p) * 4)            # conservative (x2 buf)
    per_row = (2 * in_p * itemsize           # x block (double-buffered)
               + 2 * out_p * out_itemsize    # out block (double-buffered)
               + hid_eff * 4                 # f32 activation (chunk)
               + out_p * 4)                  # f32 accumulator
    budget = usable - weight_bytes - (2 << 20)
    if budget > per_row * row_align:
        cap_rows = (budget // per_row) // row_align * row_align
        block_rows = max(row_align, min(int(block_rows), int(cap_rows)))
    else:
        block_rows = row_align

    # ---- batch tiling: pad only to row alignment, split evenly over the grid --
    B_align = _round_up(max(B, 1), row_align)
    n_steps = _cdiv(B_align, block_rows)
    bm = _round_up(_cdiv(B_align, n_steps), row_align)
    B_p = bm * n_steps

    x_p = jnp.pad(x.astype(cdt), ((0, B_p - B), (0, in_p - in_f)))

    est_vmem = weight_bytes + per_row * bm
    vmem_limit = int(min(vmem_cap * 0.98, max(32 << 20, est_vmem + (8 << 20))))

    cost = pl.CostEstimate(
        flops=2 * B_p * (in_p * hid_p + hid_p * out_p),
        transcendentals=B_p * hid_p,
        bytes_accessed=(x_p.size * itemsize
                        + params["w1"].size * itemsize
                        + params["w2"].size * itemsize
                        + (params["b1"].size + params["b2"].size) * 4
                        + B_p * out_p * out_itemsize),
    )

    if hid_c is not None:
        kernel = _make_chunked_kernel(n_chunks, hid_c)
    else:
        kernel = perception_kernel

    vmem = pltpu.MemorySpace.VMEM

    def run(single_buffer_weights):
        def const_spec(shape):
            # Grid-invariant operands: index_map is constant, so a single VMEM
            # buffer suffices (halves their footprint when supported).
            if single_buffer_weights:
                return pl.BlockSpec(shape, lambda i: (0, 0), memory_space=vmem,
                                    pipeline_mode=pl.Buffered(1))
            return pl.BlockSpec(shape, lambda i: (0, 0), memory_space=vmem)

        grid_spec = pltpu.PrefetchScalarGridSpec(
            num_scalar_prefetch=0,
            grid=(n_steps,),
            in_specs=[
                pl.BlockSpec((bm, in_p), lambda i: (i, 0), memory_space=vmem),
                const_spec((in_p, hid_p)),
                const_spec((1, hid_p)),
                const_spec((hid_p, out_p)),
                const_spec((1, out_p)),
            ],
            out_specs=pl.BlockSpec((bm, out_p), lambda i: (i, 0),
                                   memory_space=vmem),
        )
        return pl.pallas_call(
            kernel,
            out_shape=jax.ShapeDtypeStruct((B_p, out_p), out_dtype),
            grid_spec=grid_spec,
            compiler_params=pltpu.CompilerParams(
                dimension_semantics=("parallel",),
                vmem_limit_bytes=vmem_limit),
            cost_estimate=cost,
        )(x_p, params["w1"], params["b1"], params["w2"], params["b2"])

    want_single_buffer = hasattr(pl, "Buffered")
    try:
        y_p = run(want_single_buffer)
    except Exception:
        if not want_single_buffer:
            raise
        y_p = run(False)  # fall back to default double-buffered weight specs

    return y_p[:B, :params["out_f"]]


# ----------------------------------------------------------------------------
# self-test
# ----------------------------------------------------------------------------
if __name__ == "__main__":
    # Shapes implied by the module: x is [batch, in_features].
    batch, in_features, hidden_features, out_features = 8, 32, 64, 16

    key = jax.random.PRNGKey(0)
    kx, kw1, kb1, kw2, kb2 = jax.random.split(key, 5)

    x = jax.random.normal(kx, (batch, in_features), dtype=jnp.float32)
    w1 = jax.random.normal(kw1, (in_features, hidden_features), dtype=jnp.float32)
    b1 = jax.random.normal(kb1, (hidden_features,), dtype=jnp.float32)
    w2 = jax.random.normal(kw2, (hidden_features, out_features), dtype=jnp.float32)
    b2 = jax.random.normal(kb2, (out_features,), dtype=jnp.float32)

    ref = jax.nn.sigmoid(x @ w1 + b1) @ w2 + b2

    # 1) exact f32 path — tight tolerance.
    p_f32 = prepare_params(w1, b1, w2, b2, compute_dtype=jnp.float32)
    y_f32 = perception_forward(x, p_f32)
    jax.block_until_ready(y_f32)
    assert y_f32.shape == (batch, out_features)
    assert jnp.allclose(y_f32, ref, atol=1e-4, rtol=1e-4), "f32 path mismatch"

    # 2) default performance path (bf16 MXU inputs, f32 accumulation) — looser.
    p_bf16 = prepare_params(w1, b1, w2, b2)   # auto -> bfloat16 matmul inputs
    y_bf16 = perception_forward(x, p_bf16)
    jax.block_until_ready(y_bf16)
    assert y_bf16.shape == (batch, out_features)
    assert jnp.allclose(y_bf16, ref, atol=0.6, rtol=0.1), "bf16 path mismatch"

    # 3) hid-chunked kernel + multi-step grid, exercised on odd shapes (f32).
    b3, i3, h3, o3 = 40, 50, 200, 24
    ka, kb_, kc, kd, ke = jax.random.split(jax.random.PRNGKey(1), 5)
    x3 = jax.random.normal(ka, (b3, i3), dtype=jnp.float32)
    w13 = jax.random.normal(kb_, (i3, h3), dtype=jnp.float32)
    b13 = jax.random.normal(kc, (h3,), dtype=jnp.float32)
    w23 = jax.random.normal(kd, (h3, o3), dtype=jnp.float32)
    b23 = jax.random.normal(ke, (o3,), dtype=jnp.float32)
    ref3 = jax.nn.sigmoid(x3 @ w13 + b13) @ w23 + b23

    p3 = prepare_params(w13, b13, w23, b23, compute_dtype=jnp.float32,
                        hid_block=128)          # force the chunked body
    y3 = perception_forward(x3, p3, block_rows=16)  # force a 3-step grid
    jax.block_until_ready(y3)
    assert y3.shape == (b3, o3)
    assert jnp.allclose(y3, ref3, atol=1e-3, rtol=1e-3), "chunked path mismatch"

    print("KERNEL_OK")
</pallas_src>

<mosaic_0001>
module attributes {stable_mosaic.version = 11 : i64} {
  func.func @perception_kernel(%arg0: i32, %arg1: memref<8x128xf32, #tpu.memory_space<vmem>>, %arg2: memref<128x128xf32, #tpu.memory_space<vmem>>, %arg3: memref<1x128xf32, #tpu.memory_space<vmem>>, %arg4: memref<128x128xf32, #tpu.memory_space<vmem>>, %arg5: memref<1x128xf32, #tpu.memory_space<vmem>>, %arg6: memref<8x128xf32, #tpu.memory_space<vmem>>) attributes {dimension_semantics = [#tpu.dimension_semantics<parallel>], iteration_bounds = array<i64: 1>, scalar_prefetch = 0 : i64, scratch_operands = 0 : i64, tpu.core_type = #tpu.core_type<tc>, window_params = [{transform_indices = @transform_0, window_bounds = array<i64: 8, 128>}, {pipeline_mode = #tpu.pipeline_mode<synchronous>, transform_indices = @transform_1, window_bounds = array<i64: 128, 128>}, {pipeline_mode = #tpu.pipeline_mode<synchronous>, transform_indices = @transform_2, window_bounds = array<i64: 1, 128>}, {pipeline_mode = #tpu.pipeline_mode<synchronous>, transform_indices = @transform_3, window_bounds = array<i64: 128, 128>}, {pipeline_mode = #tpu.pipeline_mode<synchronous>, transform_indices = @transform_4, window_bounds = array<i64: 1, 128>}, {transform_indices = @transform_5, window_bounds = array<i64: 8, 128>}]} {
    %c0 = arith.constant 0 : index
    %c0_0 = arith.constant 0 : index
    %0 = vector.load %arg1[%c0, %c0_0] : memref<8x128xf32, #tpu.memory_space<vmem>>, vector<8x128xf32>
    %c0_1 = arith.constant 0 : index
    %c0_2 = arith.constant 0 : index
    %1 = vector.load %arg2[%c0_1, %c0_2] : memref<128x128xf32, #tpu.memory_space<vmem>>, vector<128x128xf32>
    %cst = arith.constant dense<0.000000e+00> : vector<8x128xf32>
    %2 = tpu.matmul %0, %1, %cst {dimension_numbers = #tpu.dot_dimension_numbers<[1], [0], [0], [1], [0, 0, 1, 1], [], []>} : vector<8x128xf32>, vector<128x128xf32>, vector<8x128xf32> -> vector<8x128xf32>
    %c0_3 = arith.constant 0 : index
    %c0_4 = arith.constant 0 : index
    %3 = vector.load %arg3[%c0_3, %c0_4] : memref<1x128xf32, #tpu.memory_space<vmem>>, vector<1x128xf32>
    %4 = vector.broadcast %3 : vector<1x128xf32> to vector<8x128xf32>
    %5 = arith.addf %2, %4 : vector<8x128xf32>
    %cst_5 = arith.constant 5.000000e-01 : f32
    %6 = vector.broadcast %cst_5 : f32 to vector<8x128xf32>
    %7 = arith.mulf %6, %5 : vector<8x128xf32>
    %8 = math.tanh %7 : vector<8x128xf32>
    %cst_6 = arith.constant 1.000000e+00 : f32
    %9 = vector.broadcast %cst_6 : f32 to vector<8x128xf32>
    %10 = arith.addf %8, %9 : vector<8x128xf32>
    %cst_7 = arith.constant 5.000000e-01 : f32
    %11 = vector.broadcast %cst_7 : f32 to vector<8x128xf32>
    %12 = arith.mulf %11, %10 : vector<8x128xf32>
    %c0_8 = arith.constant 0 : index
    %c0_9 = arith.constant 0 : index
    %13 = vector.load %arg4[%c0_8, %c0_9] : memref<128x128xf32, #tpu.memory_space<vmem>>, vector<128x128xf32>
    %cst_10 = arith.constant dense<0.000000e+00> : vector<8x128xf32>
    %14 = tpu.matmul %12, %13, %cst_10 {dimension_numbers = #tpu.dot_dimension_numbers<[1], [0], [0], [1], [0, 0, 1, 1], [], []>} : vector<8x128xf32>, vector<128x128xf32>, vector<8x128xf32> -> vector<8x128xf32>
    %c0_11 = arith.constant 0 : index
    %c0_12 = arith.constant 0 : index
    %15 = vector.load %arg5[%c0_11, %c0_12] : memref<1x128xf32, #tpu.memory_space<vmem>>, vector<1x128xf32>
    %16 = vector.broadcast %15 : vector<1x128xf32> to vector<8x128xf32>
    %17 = arith.addf %14, %16 : vector<8x128xf32>
    %c0_13 = arith.constant 0 : index
    %c0_14 = arith.constant 0 : index
    %18 = vector.load %arg6[%c0_13, %c0_14] : memref<8x128xf32, #tpu.memory_space<vmem>>, vector<8x128xf32>
    tpu.vector_store %arg6[%c0_13, %c0_14], %17 {strides = array<i32>} : memref<8x128xf32, #tpu.memory_space<vmem>>, vector<8x128xf32>,
    return
  }
  func.func @transform_0(%arg0: i32) -> (i32, i32) {
    %c0_i32 = arith.constant 0 : i32
    %c0_i32_0 = arith.constant 0 : i32
    return %arg0, %c0_i32 : i32, i32
  }
  func.func @transform_1(%arg0: i32) -> (i32, i32) {
    %c0_i32 = arith.constant 0 : i32
    %c0_i32_0 = arith.constant 0 : i32
    %c0_i32_1 = arith.constant 0 : i32
    return %c0_i32, %c0_i32_0 : i32, i32
  }
  func.func @transform_2(%arg0: i32) -> (i32, i32) {
    %c0_i32 = arith.constant 0 : i32
    %c0_i32_0 = arith.constant 0 : i32
    %c0_i32_1 = arith.constant 0 : i32
    return %c0_i32, %c0_i32_0 : i32, i32
  }
  func.func @transform_3(%arg0: i32) -> (i32, i32) {
    %c0_i32 = arith.constant 0 : i32
    %c0_i32_0 = arith.constant 0 : i32
    %c0_i32_1 = arith.constant 0 : i32
    return %c0_i32, %c0_i32_0 : i32, i32
  }
  func.func @transform_4(%arg0: i32) -> (i32, i32) {
    %c0_i32 = arith.constant 0 : i32
    %c0_i32_0 = arith.constant 0 : i32
    %c0_i32_1 = arith.constant 0 : i32
    return %c0_i32, %c0_i32_0 : i32, i32
  }
  func.func @transform_5(%arg0: i32) -> (i32, i32) {
    %c0_i32 = arith.constant 0 : i32
    %c0_i32_0 = arith.constant 0 : i32
    return %arg0, %c0_i32 : i32, i32
  }
}

module attributes {stable_mosaic.version = 11 : i64} {
  func.func @perception_kernel(%arg0: i32, %arg1: memref<8x128xf32, #tpu.memory_space<vmem>>, %arg2: memref<128x128xf32, #tpu.memory_space<vmem>>, %arg3: memref<1x128xf32, #tpu.memory_space<vmem>>, %arg4: memref<128x128xf32, #tpu.memory_space<vmem>>, %arg5: memref<1x128xf32, #tpu.memory_space<vmem>>, %arg6: memref<8x128xf32, #tpu.memory_space<vmem>>) attributes {dimension_semantics = [#tpu.dimension_semantics<parallel>], iteration_bounds = array<i64: 1>, scalar_prefetch = 0 : i64, scratch_operands = 0 : i64, tpu.core_type = #tpu.core_type<tc>, window_params = [{transform_indices = @transform_0, window_bounds = array<i64: 8, 128>}, {pipeline_mode = #tpu.pipeline_mode<synchronous>, transform_indices = @transform_1, window_bounds = array<i64: 128, 128>}, {pipeline_mode = #tpu.pipeline_mode<synchronous>, transform_indices = @transform_2, window_bounds = array<i64: 1, 128>}, {pipeline_mode = #tpu.pipeline_mode<synchronous>, transform_indices = @transform_3, window_bounds = array<i64: 128, 128>}, {pipeline_mode = #tpu.pipeline_mode<synchronous>, transform_indices = @transform_4, window_bounds = array<i64: 1, 128>}, {transform_indices = @transform_5, window_bounds = array<i64: 8, 128>}]} {
    %c0 = arith.constant 0 : index
    %c0_0 = arith.constant 0 : index
    %0 = vector.load %arg1[%c0, %c0_0] : memref<8x128xf32, #tpu.memory_space<vmem>>, vector<8x128xf32>
    %c0_1 = arith.constant 0 : index
    %c0_2 = arith.constant 0 : index
    %1 = vector.load %arg2[%c0_1, %c0_2] : memref<128x128xf32, #tpu.memory_space<vmem>>, vector<128x128xf32>
    %cst = arith.constant dense<0.000000e+00> : vector<8x128xf32>
    %2 = tpu.matmul %0, %1, %cst {dimension_numbers = #tpu.dot_dimension_numbers<[1], [0], [0], [1], [0, 0, 1, 1], [], []>} : vector<8x128xf32>, vector<128x128xf32>, vector<8x128xf32> -> vector<8x128xf32>
    %c0_3 = arith.constant 0 : index
    %c0_4 = arith.constant 0 : index
    %3 = vector.load %arg3[%c0_3, %c0_4] : memref<1x128xf32, #tpu.memory_space<vmem>>, vector<1x128xf32>
    %4 = vector.broadcast %3 : vector<1x128xf32> to vector<8x128xf32>
    %5 = arith.addf %2, %4 : vector<8x128xf32>
    %cst_5 = arith.constant 5.000000e-01 : f32
    %6 = vector.broadcast %cst_5 : f32 to vector<8x128xf32>
    %7 = arith.mulf %6, %5 : vector<8x128xf32>
    %8 = math.tanh %7 : vector<8x128xf32>
    %cst_6 = arith.constant 1.000000e+00 : f32
    %9 = vector.broadcast %cst_6 : f32 to vector<8x128xf32>
    %10 = arith.addf %8, %9 : vector<8x128xf32>
    %cst_7 = arith.constant 5.000000e-01 : f32
    %11 = vector.broadcast %cst_7 : f32 to vector<8x128xf32>
    %12 = arith.mulf %11, %10 : vector<8x128xf32>
    %c0_8 = arith.constant 0 : index
    %c0_9 = arith.constant 0 : index
    %13 = vector.load %arg4[%c0_8, %c0_9] : memref<128x128xf32, #tpu.memory_space<vmem>>, vector<128x128xf32>
    %cst_10 = arith.constant dense<0.000000e+00> : vector<8x128xf32>
    %14 = tpu.matmul %12, %13, %cst_10 {dimension_numbers = #tpu.dot_dimension_numbers<[1], [0], [0], [1], [0, 0, 1, 1], [], []>} : vector<8x128xf32>, vector<128x128xf32>, vector<8x128xf32> -> vector<8x128xf32>
    %c0_11 = arith.constant 0 : index
    %c0_12 = arith.constant 0 : index
    %15 = vector.load %arg5[%c0_11, %c0_12] : memref<1x128xf32, #tpu.memory_space<vmem>>, vector<1x128xf32>
    %16 = vector.broadcast %15 : vector<1x128xf32> to vector<8x128xf32>
    %17 = arith.addf %14, %16 : vector<8x128xf32>
    %c0_13 = arith.constant 0 : index
    %c0_14 = arith.constant 0 : index
    %18 = vector.load %arg6[%c0_13, %c0_14] : memref<8x128xf32, #tpu.memory_space<vmem>>, vector<8x128xf32>
    tpu.vector_store %arg6[%c0_13, %c0_14], %17 {strides = array<i32>} : memref<8x128xf32, #tpu.memory_space<vmem>>, vector<8x128xf32>,
    return
  }
  func.func @transform_0(%arg0: i32) -> (i32, i32) {
    %c0_i32 = arith.constant 0 : i32
    %c0_i32_0 = arith.constant 0 : i32
    return %arg0, %c0_i32 : i32, i32
  }
  func.func @transform_1(%arg0: i32) -> (i32, i32) {
    %c0_i32 = arith.constant 0 : i32
    %c0_i32_0 = arith.constant 0 : i32
    %c0_i32_1 = arith.constant 0 : i32
    return %c0_i32, %c0_i32_0 : i32, i32
  }
  func.func @transform_2(%arg0: i32) -> (i32, i32) {
    %c0_i32 = arith.constant 0 : i32
    %c0_i32_0 = arith.constant 0 : i32
    %c0_i32_1 = arith.constant 0 : i32
    return %c0_i32, %c0_i32_0 : i32, i32
  }
  func.func @transform_3(%arg0: i32) -> (i32, i32) {
    %c0_i32 = arith.constant 0 : i32
    %c0_i32_0 = arith.constant 0 : i32
    %c0_i32_1 = arith.constant 0 : i32
    return %c0_i32, %c0_i32_0 : i32, i32
  }
  func.func @transform_4(%arg0: i32) -> (i32, i32) {
    %c0_i32 = arith.constant 0 : i32
    %c0_i32_0 = arith.constant 0 : i32
    %c0_i32_1 = arith.constant 0 : i32
    return %c0_i32, %c0_i32_0 : i32, i32
  }
  func.func @transform_5(%arg0: i32) -> (i32, i32) {
    %c0_i32 = arith.constant 0 : i32
    %c0_i32_0 = arith.constant 0 : i32
    return %arg0, %c0_i32 : i32, i32
  }
}

</mosaic_0001>

<llo_original>
// kernel: tpu_custom_call.1
$region0: #{tpu_custom_call.1}
  #allocation0 [shape = 'u32[]', space=smem, size = 0x4, offset = 0x4, fixed_abs, tag = 'smem constant byte address 0x4 - core index']
  #allocation1 [shape = 'u32[72,128]{1,0:T(1,128)}', space=vmem, size = 0x9000, scoped, tag = 'internal scratch']
  %s0 = inlined_call_operand.hbm [shape: f32[8,128], index: 0, kind: input, shape index: {}]
  %s1 = inlined_call_operand.hbm [shape: f32[128,128], index: 1, kind: input, shape index: {}]
  %s2 = inlined_call_operand.vmem [shape: f32[1,128], index: 2, kind: input, shape index: {}]
  %s3 = inlined_call_operand.hbm [shape: f32[128,128], index: 3, kind: input, shape index: {}]
  %s4 = inlined_call_operand.vmem [shape: f32[1,128], index: 4, kind: input, shape index: {}]
  %s5 = inlined_call_operand.hbm [shape: f32[8,128], index: 5, kind: output, shape index: {}]
  %s6 = sld [smem:[#allocation0]]
  $region42: #{tpu_custom_call.1} parent=0
    _
  %s8 = ssub.s32 1, %s6
  %s9 = scalar_select 0, %s8, %s6
  $region1: #{tpu_custom_call.1} parent=0
    #allocation2 [shape = 'u8[4096]{0}', space=vmem, size = 0x1000, scoped, tag = 'input window, operand 0, single buffered']
    #allocation3 [shape = 's32[1]{0}', space=sflag, size = 0x4, scoped, tag = 'scoped memory for tpu_custom_call.1']
    #allocation4 [shape = 's32[1]{0}', space=sflag, size = 0x4, scoped, tag = 'scoped memory for tpu_custom_call.1']
    #allocation5 [shape = 'u8[65536]{0}', space=vmem, size = 0x10000, scoped, tag = 'input window, operand 1, single buffered']
    #allocation6 [shape = 's32[1]{0}', space=sflag, size = 0x4, scoped, tag = 'scoped memory for tpu_custom_call.1']
    #allocation7 [shape = 'u8[65536]{0}', space=vmem, size = 0x10000, scoped, tag = 'input window, operand 3, single buffered']
    #allocation8 [shape = 'u8[4096]{0}', space=vmem, size = 0x1000, scoped, tag = 'output window, operand 0, single buffered']
    %10 = vsyncpa [#allocation3], 0
    %11 = vsyncpa [#allocation6], 0
    %12 = vsyncpa [#allocation4], 0
    // Predicated region
    $region2: #{tpu_custom_call.1} parent=1 // pred_check
      _
    $region3: #{tpu_custom_call.1} parent=1 // pred_check_branch
      %14 = sbr.rel (0) target = $region5
    $region4: #{tpu_custom_call.1} parent=1 // pred_region
      %16 = vsyncadd [#allocation3], 0
      %s18 = sshll.u32 %s0, 4
      %s19 = int_to_ptr.hbm [resolvable:$true] %s18
      %s20 = sshll.u32 [#allocation2], 4
      %s21 = int_to_ptr.vmem [resolvable:$true] %s20
      %23 = dma.hbm_to_vmem [thread:$0]  %s19, 128, %s21, [#allocation3]
    $region5: #{tpu_custom_call.1} parent=1 // pred_fallthru
      _
    // Predicated region
    $region6: #{tpu_custom_call.1} parent=1 // pred_check
      _
    $region7: #{tpu_custom_call.1} parent=1 // pred_check_branch
      %25 = sbr.rel (0) target = $region9
    $region8: #{tpu_custom_call.1} parent=1 // pred_region
      %27 = vsyncadd [#allocation6], 0
      %s28 = sshll.u32 %s1, 4
      %s29 = int_to_ptr.hbm [resolvable:$true] %s28
      %s30 = sshll.u32 [#allocation5], 4
      %s31 = int_to_ptr.vmem [resolvable:$true] %s30
      %36 = dma.hbm_to_vmem [thread:$0]  %s29, 2048, %s31, [#allocation6], 128, 128, 8
    $region9: #{tpu_custom_call.1} parent=1 // pred_fallthru
      _
    // Predicated region
    $region10: #{tpu_custom_call.1} parent=1 // pred_check
      _
    $region11: #{tpu_custom_call.1} parent=1 // pred_check_branch
      %38 = sbr.rel (0) target = $region13
    $region12: #{tpu_custom_call.1} parent=1 // pred_region
      _
    $region13: #{tpu_custom_call.1} parent=1 // pred_fallthru
      _
    // Predicated region
    $region14: #{tpu_custom_call.1} parent=1 // pred_check
      _
    $region15: #{tpu_custom_call.1} parent=1 // pred_check_branch
      %40 = sbr.rel (0) target = $region17
    $region16: #{tpu_custom_call.1} parent=1 // pred_region
      %42 = vsyncadd [#allocation6], 0
      %s43 = sshll.u32 %s3, 4
      %s44 = int_to_ptr.hbm [resolvable:$true] %s43
      %s45 = sshll.u32 [#allocation7], 4
      %s46 = int_to_ptr.vmem [resolvable:$true] %s45
      %51 = dma.hbm_to_vmem [thread:$0]  %s44, 2048, %s46, [#allocation6], 128, 128, 8
    $region17: #{tpu_custom_call.1} parent=1 // pred_fallthru
      _
    // Predicated region
    $region18: #{tpu_custom_call.1} parent=1 // pred_check
      _
    $region19: #{tpu_custom_call.1} parent=1 // pred_check_branch
      %53 = sbr.rel (0) target = $region21
    $region20: #{tpu_custom_call.1} parent=1 // pred_region
      _
    $region21: #{tpu_custom_call.1} parent=1 // pred_fallthru
      _
    // Predicated region
    $region22: #{tpu_custom_call.1} parent=1 // pred_check
      _
    $region23: #{tpu_custom_call.1} parent=1 // pred_check_branch
      %55 = sbr.rel (0) target = $region25
    $region24: #{tpu_custom_call.1} parent=1 // pred_region
      %57 = dma.done [#allocation3], 128
    $region25: #{tpu_custom_call.1} parent=1 // pred_fallthru
      _
    // Predicated region
    $region26: #{tpu_custom_call.1} parent=1 // pred_check
      _
    $region27: #{tpu_custom_call.1} parent=1 // pred_check_branch
      %59 = sbr.rel (0) target = $region29
    $region28: #{tpu_custom_call.1} parent=1 // pred_region
      %61 = dma.done [#allocation6], 2048
    $region29: #{tpu_custom_call.1} parent=1 // pred_fallthru
      _
    // Predicated region
    $region30: #{tpu_custom_call.1} parent=1 // pred_check
      _
    $region31: #{tpu_custom_call.1} parent=1 // pred_check_branch
      %63 = sbr.rel (0) target = $region33
    $region32: #{tpu_custom_call.1} parent=1 // pred_region
      %65 = dma.done [#allocation6], 2048
    $region33: #{tpu_custom_call.1} parent=1 // pred_fallthru
      _
    %v66 = vld [vmem:[#allocation2] sm:$0xff]
    %v67 = vld [vmem:[#allocation5] sm:$0xff]
    %v68 = vld [vmem:[#allocation5 + $0x8] sm:$0xff]
    %v69 = vld [vmem:[#allocation5 + $0x10] sm:$0xff]
    %v70 = vld [vmem:[#allocation5 + $0x18] sm:$0xff]
    %v71 = vld [vmem:[#allocation5 + $0x20] sm:$0xff]
    %v72 = vld [vmem:[#allocation5 + $0x28] sm:$0xff]
    %v73 = vld [vmem:[#allocation5 + $0x30] sm:$0xff]
    %v74 = vld [vmem:[#allocation5 + $0x38] sm:$0xff]
    %v75 = vld [vmem:[#allocation5 + $0x40] sm:$0xff]
    %v76 = vld [vmem:[#allocation5 + $0x48] sm:$0xff]
    %v77 = vld [vmem:[#allocation5 + $0x50] sm:$0xff]
    %v78 = vld [vmem:[#allocation5 + $0x58] sm:$0xff]
    %v79 = vld [vmem:[#allocation5 + $0x60] sm:$0xff]
    %v80 = vld [vmem:[#allocation5 + $0x68] sm:$0xff]
    %v81 = vld [vmem:[#allocation5 + $0x70] sm:$0xff]
    %v82 = vld [vmem:[#allocation5 + $0x78] sm:$0xff]
    %v83 = vld [vmem:[%s2] sm:$0x1]
    %v85 = vperm.slane %v83, 0
    %87 = vmatpush.msra.mxu0 %v82
    %88 = vmatpush.msra.mxu0 %v81
    %89 = vmatpush.msra.mxu0 %v80
    %90 = vmatpush.msra.mxu0 %v79
    %91 = vmatpush.msra.mxu0 %v78
    %92 = vmatpush.msra.mxu0 %v77
    %93 = vmatpush.msra.mxu0 %v76
    %94 = vmatpush.msra.mxu0 %v75
    %95 = vmatpush.msra.mxu0 %v74
    %96 = vmatpush.msra.mxu0 %v73
    %97 = vmatpush.msra.mxu0 %v72
    %98 = vmatpush.msra.mxu0 %v71
    %99 = vmatpush.msra.mxu0 %v70
    %100 = vmatpush.msra.mxu0 %v69
    %101 = vmatpush.msra.mxu0 %v68
    %102 = vmatpush.msra.mxu0 %v67
    %103 = vmatmul.f32.gmra.mxu0 %v66
    %v104 = vpop.f32.mrf.mxu0
    %v105 = vadd.f32 %v85, %v104
    %106 = vdwg.mxu0
    %v107 = vmul.f32 %v105, 0.5
    %v108 = vtanh.pop %v107
    %v109 = vadd.f32 %v108, 1.0
    %v110 = vmul.f32 %v109, 0.5
    %v111 = vld [vmem:[#allocation7] sm:$0xff]
    %v112 = vld [vmem:[#allocation7 + $0x8] sm:$0xff]
    %v113 = vld [vmem:[#allocation7 + $0x10] sm:$0xff]
    %v114 = vld [vmem:[#allocation7 + $0x18] sm:$0xff]
    %v115 = vld [vmem:[#allocation7 + $0x20] sm:$0xff]
    %v116 = vld [vmem:[#allocation7 + $0x28] sm:$0xff]
    %v117 = vld [vmem:[#allocation7 + $0x30] sm:$0xff]
    %v118 = vld [vmem:[#allocation7 + $0x38] sm:$0xff]
    %v119 = vld [vmem:[#allocation7 + $0x40] sm:$0xff]
    %v120 = vld [vmem:[#allocation7 + $0x48] sm:$0xff]
    %v121 = vld [vmem:[#allocation7 + $0x50] sm:$0xff]
    %v122 = vld [vmem:[#allocation7 + $0x58] sm:$0xff]
    %v123 = vld [vmem:[#allocation7 + $0x60] sm:$0xff]
    %v124 = vld [vmem:[#allocation7 + $0x68] sm:$0xff]
    %v125 = vld [vmem:[#allocation7 + $0x70] sm:$0xff]
    %v126 = vld [vmem:[#allocation7 + $0x78] sm:$0xff]
    %v127 = vld [vmem:[%s4] sm:$0x1]
    %v129 = vperm.slane %v127, 0
    %131 = vmatpush.msra.mxu0 %v126
    %132 = vmatpush.msra.mxu0 %v125
    %133 = vmatpush.msra.mxu0 %v124
    %134 = vmatpush.msra.mxu0 %v123
    %135 = vmatpush.msra.mxu0 %v122
    %136 = vmatpush.msra.mxu0 %v121
    %137 = vmatpush.msra.mxu0 %v120
    %138 = vmatpush.msra.mxu0 %v119
    %139 = vmatpush.msra.mxu0 %v118
    %140 = vmatpush.msra.mxu0 %v117
    %141 = vmatpush.msra.mxu0 %v116
    %142 = vmatpush.msra.mxu0 %v115
    %143 = vmatpush.msra.mxu0 %v114
    %144 = vmatpush.msra.mxu0 %v113
    %145 = vmatpush.msra.mxu0 %v112
    %146 = vmatpush.msra.mxu0 %v111
    %147 = vmatmul.f32.gmra.mxu0 %v110
    %v148 = vpop.f32.mrf.mxu0
    %v149 = vadd.f32 %v129, %v148
    %150 = vdwg.mxu0
    %151 = vst [vmem:[#allocation8] sm:$0xff] %v149
    // Predicated region
    $region34: #{tpu_custom_call.1} parent=1 // pred_check
      _
    $region35: #{tpu_custom_call.1} parent=1 // pred_check_branch
      %153 = sbr.rel (0) target = $region37
    $region36: #{tpu_custom_call.1} parent=1 // pred_region
      %155 = vsyncadd [#allocation4], 0
      %s157 = sshll.u32 [#allocation8], 4
      %s158 = int_to_ptr.vmem [resolvable:$true] %s157
      %s159 = sshll.u32 %s5, 4
      %s160 = int_to_ptr.hbm [resolvable:$true] %s159
      %162 = dma.vmem_to_hbm [thread:$0]  %s158, 128, %s160, [#allocation4]
    $region37: #{tpu_custom_call.1} parent=1 // pred_fallthru
      _
    // Predicated region
    $region38: #{tpu_custom_call.1} parent=1 // pred_check
      _
    $region39: #{tpu_custom_call.1} parent=1 // pred_check_branch
      %164 = sbr.rel (0) target = $region41
    $region40: #{tpu_custom_call.1} parent=1 // pred_region
      %166 = dma.done [#allocation4], 128
    $region41: #{tpu_custom_call.1} parent=1 // pred_fallthru
      _
    %167 = vsyncpa [#allocation3], 1
    %168 = vsyncpa [#allocation6], 1
    %169 = vsyncpa [#allocation4], 1

// kernel: tpu_custom_call.1
$region0: #{tpu_custom_call.1}
  #allocation0 [shape = 'u32[]', space=smem, size = 0x4, offset = 0x4, fixed_abs, tag = 'smem constant byte address 0x4 - core index']
  #allocation1 [shape = 'u32[72,128]{1,0:T(1,128)}', space=vmem, size = 0x9000, scoped, tag = 'internal scratch']
  %s0 = inlined_call_operand.hbm [shape: f32[8,128], index: 0, kind: input, shape index: {}]
  %s1 = inlined_call_operand.hbm [shape: f32[128,128], index: 1, kind: input, shape index: {}]
  %s2 = inlined_call_operand.vmem [shape: f32[1,128], index: 2, kind: input, shape index: {}]
  %s3 = inlined_call_operand.hbm [shape: f32[128,128], index: 3, kind: input, shape index: {}]
  %s4 = inlined_call_operand.vmem [shape: f32[1,128], index: 4, kind: input, shape index: {}]
  %s5 = inlined_call_operand.hbm [shape: f32[8,128], index: 5, kind: output, shape index: {}]
  %s6 = sld [smem:[#allocation0]]
  $region42: #{tpu_custom_call.1} parent=0
    _
  %s8 = ssub.s32 1, %s6
  %s9 = scalar_select 0, %s8, %s6
  $region1: #{tpu_custom_call.1} parent=0
    #allocation2 [shape = 'u8[4096]{0}', space=vmem, size = 0x1000, scoped, tag = 'input window, operand 0, single buffered']
    #allocation3 [shape = 's32[1]{0}', space=sflag, size = 0x4, scoped, tag = 'scoped memory for tpu_custom_call.1']
    #allocation4 [shape = 's32[1]{0}', space=sflag, size = 0x4, scoped, tag = 'scoped memory for tpu_custom_call.1']
    #allocation5 [shape = 'u8[65536]{0}', space=vmem, size = 0x10000, scoped, tag = 'input window, operand 1, single buffered']
    #allocation6 [shape = 's32[1]{0}', space=sflag, size = 0x4, scoped, tag = 'scoped memory for tpu_custom_call.1']
    #allocation7 [shape = 'u8[65536]{0}', space=vmem, size = 0x10000, scoped, tag = 'input window, operand 3, single buffered']
    #allocation8 [shape = 'u8[4096]{0}', space=vmem, size = 0x1000, scoped, tag = 'output window, operand 0, single buffered']
    %10 = vsyncpa [#allocation3], 0
    %11 = vsyncpa [#allocation6], 0
    %12 = vsyncpa [#allocation4], 0
    // Predicated region
    $region2: #{tpu_custom_call.1} parent=1 // pred_check
      _
    $region3: #{tpu_custom_call.1} parent=1 // pred_check_branch
      %14 = sbr.rel (0) target = $region5
    $region4: #{tpu_custom_call.1} parent=1 // pred_region
      %16 = vsyncadd [#allocation3], 0
      %s18 = sshll.u32 %s0, 4
      %s19 = int_to_ptr.hbm [resolvable:$true] %s18
      %s20 = sshll.u32 [#allocation2], 4
      %s21 = int_to_ptr.vmem [resolvable:$true] %s20
      %23 = dma.hbm_to_vmem [thread:$0]  %s19, 128, %s21, [#allocation3]
    $region5: #{tpu_custom_call.1} parent=1 // pred_fallthru
      _
    // Predicated region
    $region6: #{tpu_custom_call.1} parent=1 // pred_check
      _
    $region7: #{tpu_custom_call.1} parent=1 // pred_check_branch
      %25 = sbr.rel (0) target = $region9
    $region8: #{tpu_custom_call.1} parent=1 // pred_region
      %27 = vsyncadd [#allocation6], 0
      %s28 = sshll.u32 %s1, 4
      %s29 = int_to_ptr.hbm [resolvable:$true] %s28
      %s30 = sshll.u32 [#allocation5], 4
      %s31 = int_to_ptr.vmem [resolvable:$true] %s30
      %36 = dma.hbm_to_vmem [thread:$0]  %s29, 2048, %s31, [#allocation6], 128, 128, 8
    $region9: #{tpu_custom_call.1} parent=1 // pred_fallthru
      _
    // Predicated region
    $region10: #{tpu_custom_call.1} parent=1 // pred_check
      _
    $region11: #{tpu_custom_call.1} parent=1 // pred_check_branch
      %38 = sbr.rel (0) target = $region13
    $region12: #{tpu_custom_call.1} parent=1 // pred_region
      _
    $region13: #{tpu_custom_call.1} parent=1 // pred_fallthru
      _
    // Predicated region
    $region14: #{tpu_custom_call.1} parent=1 // pred_check
      _
    $region15: #{tpu_custom_call.1} parent=1 // pred_check_branch
      %40 = sbr.rel (0) target = $region17
    $region16: #{tpu_custom_call.1} parent=1 // pred_region
      %42 = vsyncadd [#allocation6], 0
      %s43 = sshll.u32 %s3, 4
      %s44 = int_to_ptr.hbm [resolvable:$true] %s43
      %s45 = sshll.u32 [#allocation7], 4
      %s46 = int_to_ptr.vmem [resolvable:$true] %s45
      %51 = dma.hbm_to_vmem [thread:$0]  %s44, 2048, %s46, [#allocation6], 128, 128, 8
    $region17: #{tpu_custom_call.1} parent=1 // pred_fallthru
      _
    // Predicated region
    $region18: #{tpu_custom_call.1} parent=1 // pred_check
      _
    $region19: #{tpu_custom_call.1} parent=1 // pred_check_branch
      %53 = sbr.rel (0) target = $region21
    $region20: #{tpu_custom_call.1} parent=1 // pred_region
      _
    $region21: #{tpu_custom_call.1} parent=1 // pred_fallthru
      _
    // Predicated region
    $region22: #{tpu_custom_call.1} parent=1 // pred_check
      _
    $region23: #{tpu_custom_call.1} parent=1 // pred_check_branch
      %55 = sbr.rel (0) target = $region25
    $region24: #{tpu_custom_call.1} parent=1 // pred_region
      %57 = dma.done [#allocation3], 128
    $region25: #{tpu_custom_call.1} parent=1 // pred_fallthru
      _
    // Predicated region
    $region26: #{tpu_custom_call.1} parent=1 // pred_check
      _
    $region27: #{tpu_custom_call.1} parent=1 // pred_check_branch
      %59 = sbr.rel (0) target = $region29
    $region28: #{tpu_custom_call.1} parent=1 // pred_region
      %61 = dma.done [#allocation6], 2048
    $region29: #{tpu_custom_call.1} parent=1 // pred_fallthru
      _
    // Predicated region
    $region30: #{tpu_custom_call.1} parent=1 // pred_check
      _
    $region31: #{tpu_custom_call.1} parent=1 // pred_check_branch
      %63 = sbr.rel (0) target = $region33
    $region32: #{tpu_custom_call.1} parent=1 // pred_region
      %65 = dma.done [#allocation6], 2048
    $region33: #{tpu_custom_call.1} parent=1 // pred_fallthru
      _
    %v66 = vld [vmem:[#allocation2] sm:$0xff]
    %v67 = vld [vmem:[#allocation5] sm:$0xff]
    %v68 = vld [vmem:[#allocation5 + $0x8] sm:$0xff]
    %v69 = vld [vmem:[#allocation5 + $0x10] sm:$0xff]
    %v70 = vld [vmem:[#allocation5 + $0x18] sm:$0xff]
    %v71 = vld [vmem:[#allocation5 + $0x20] sm:$0xff]
    %v72 = vld [vmem:[#allocation5 + $0x28] sm:$0xff]
    %v73 = vld [vmem:[#allocation5 + $0x30] sm:$0xff]
    %v74 = vld [vmem:[#allocation5 + $0x38] sm:$0xff]
    %v75 = vld [vmem:[#allocation5 + $0x40] sm:$0xff]
    %v76 = vld [vmem:[#allocation5 + $0x48] sm:$0xff]
    %v77 = vld [vmem:[#allocation5 + $0x50] sm:$0xff]
    %v78 = vld [vmem:[#allocation5 + $0x58] sm:$0xff]
    %v79 = vld [vmem:[#allocation5 + $0x60] sm:$0xff]
    %v80 = vld [vmem:[#allocation5 + $0x68] sm:$0xff]
    %v81 = vld [vmem:[#allocation5 + $0x70] sm:$0xff]
    %v82 = vld [vmem:[#allocation5 + $0x78] sm:$0xff]
    %v83 = vld [vmem:[%s2] sm:$0x1]
    %v85 = vperm.slane %v83, 0
    %87 = vmatpush.msra.mxu0 %v82
    %88 = vmatpush.msra.mxu0 %v81
    %89 = vmatpush.msra.mxu0 %v80
    %90 = vmatpush.msra.mxu0 %v79
    %91 = vmatpush.msra.mxu0 %v78
    %92 = vmatpush.msra.mxu0 %v77
    %93 = vmatpush.msra.mxu0 %v76
    %94 = vmatpush.msra.mxu0 %v75
    %95 = vmatpush.msra.mxu0 %v74
    %96 = vmatpush.msra.mxu0 %v73
    %97 = vmatpush.msra.mxu0 %v72
    %98 = vmatpush.msra.mxu0 %v71
    %99 = vmatpush.msra.mxu0 %v70
    %100 = vmatpush.msra.mxu0 %v69
    %101 = vmatpush.msra.mxu0 %v68
    %102 = vmatpush.msra.mxu0 %v67
    %103 = vmatmul.f32.gmra.mxu0 %v66
    %v104 = vpop.f32.mrf.mxu0
    %v105 = vadd.f32 %v85, %v104
    %106 = vdwg.mxu0
    %v107 = vmul.f32 %v105, 0.5
    %v108 = vtanh.pop %v107
    %v109 = vadd.f32 %v108, 1.0
    %v110 = vmul.f32 %v109, 0.5
    %v111 = vld [vmem:[#allocation7] sm:$0xff]
    %v112 = vld [vmem:[#allocation7 + $0x8] sm:$0xff]
    %v113 = vld [vmem:[#allocation7 + $0x10] sm:$0xff]
    %v114 = vld [vmem:[#allocation7 + $0x18] sm:$0xff]
    %v115 = vld [vmem:[#allocation7 + $0x20] sm:$0xff]
    %v116 = vld [vmem:[#allocation7 + $0x28] sm:$0xff]
    %v117 = vld [vmem:[#allocation7 + $0x30] sm:$0xff]
    %v118 = vld [vmem:[#allocation7 + $0x38] sm:$0xff]
    %v119 = vld [vmem:[#allocation7 + $0x40] sm:$0xff]
    %v120 = vld [vmem:[#allocation7 + $0x48] sm:$0xff]
    %v121 = vld [vmem:[#allocation7 + $0x50] sm:$0xff]
    %v122 = vld [vmem:[#allocation7 + $0x58] sm:$0xff]
    %v123 = vld [vmem:[#allocation7 + $0x60] sm:$0xff]
    %v124 = vld [vmem:[#allocation7 + $0x68] sm:$0xff]
    %v125 = vld [vmem:[#allocation7 + $0x70] sm:$0xff]
    %v126 = vld [vmem:[#allocation7 + $0x78] sm:$0xff]
    %v127 = vld [vmem:[%s4] sm:$0x1]
    %v129 = vperm.slane %v127, 0
    %131 = vmatpush.msra.mxu0 %v126
    %132 = vmatpush.msra.mxu0 %v125
    %133 = vmatpush.msra.mxu0 %v124
    %134 = vmatpush.msra.mxu0 %v123
    %135 = vmatpush.msra.mxu0 %v122
    %136 = vmatpush.msra.mxu0 %v121
    %137 = vmatpush.msra.mxu0 %v120
    %138 = vmatpush.msra.mxu0 %v119
    %139 = vmatpush.msra.mxu0 %v118
    %140 = vmatpush.msra.mxu0 %v117
    %141 = vmatpush.msra.mxu0 %v116
    %142 = vmatpush.msra.mxu0 %v115
    %143 = vmatpush.msra.mxu0 %v114
    %144 = vmatpush.msra.mxu0 %v113
    %145 = vmatpush.msra.mxu0 %v112
    %146 = vmatpush.msra.mxu0 %v111
    %147 = vmatmul.f32.gmra.mxu0 %v110
    %v148 = vpop.f32.mrf.mxu0
    %v149 = vadd.f32 %v129, %v148
    %150 = vdwg.mxu0
    %151 = vst [vmem:[#allocation8] sm:$0xff] %v149
    // Predicated region
    $region34: #{tpu_custom_call.1} parent=1 // pred_check
      _
    $region35: #{tpu_custom_call.1} parent=1 // pred_check_branch
      %153 = sbr.rel (0) target = $region37
    $region36: #{tpu_custom_call.1} parent=1 // pred_region
      %155 = vsyncadd [#allocation4], 0
      %s157 = sshll.u32 [#allocation8], 4
      %s158 = int_to_ptr.vmem [resolvable:$true] %s157
      %s159 = sshll.u32 %s5, 4
      %s160 = int_to_ptr.hbm [resolvable:$true] %s159
      %162 = dma.vmem_to_hbm [thread:$0]  %s158, 128, %s160, [#allocation4]
    $region37: #{tpu_custom_call.1} parent=1 // pred_fallthru
      _
    // Predicated region
    $region38: #{tpu_custom_call.1} parent=1 // pred_check
      _
    $region39: #{tpu_custom_call.1} parent=1 // pred_check_branch
      %164 = sbr.rel (0) target = $region41
    $region40: #{tpu_custom_call.1} parent=1 // pred_region
      %166 = dma.done [#allocation4], 128
    $region41: #{tpu_custom_call.1} parent=1 // pred_fallthru
      _
    %167 = vsyncpa [#allocation3], 1
    %168 = vsyncpa [#allocation6], 1
    %169 = vsyncpa [#allocation4], 1

</llo_original>
